<compile_context>
chip_gen: v5e
topology: v5e:2x2
jax: 0.10.0
libtpu: 0.0.40
codegen_flags: <defaults>
</compile_context>

<pallas_src>
import functools
import math

import jax
import jax.numpy as jnp
from jax.experimental import pallas as pl
from jax.experimental.pallas import tpu as pltpu


def _pick_tile(n):
    """Largest 'nice' tile that divides n (falls back to the full extent)."""
    for t in (256, 128, 64, 32, 16, 8):
        if n >= t and n % t == 0:
            return t
    return n


# ---------------------------------------------------------------------------
# Kernel A: QKV projection  (x tile) @ (C, D) -> q/k/v tiles, bf16, lane-dense.
# ---------------------------------------------------------------------------
def _qkv_proj_kernel(x_ref, wq_ref, wk_ref, wv_ref, q_ref, k_ref, v_ref):
    x = x_ref[0].astype(jnp.bfloat16)                         # (tm, C)
    q_ref[0] = jnp.dot(x, wq_ref[...],
                       preferred_element_type=jnp.float32).astype(q_ref.dtype)
    k_ref[0] = jnp.dot(x, wk_ref[...],
                       preferred_element_type=jnp.float32).astype(k_ref.dtype)
    v_ref[0] = jnp.dot(x, wv_ref[...],
                       preferred_element_type=jnp.float32).astype(v_ref.dtype)


# ---------------------------------------------------------------------------
# Kernel B: flash attention (online softmax over kv tiles) + output projection.
# ---------------------------------------------------------------------------
def _flash_attn_kernel(q_ref, k_ref, v_ref, wp_ref, bp_ref, o_ref,
                       q_sc, m_sc, l_sc, acc_sc, *, num_heads, head_dim):
    ki = pl.program_id(2)
    H, hd = num_heads, head_dim
    tq = q_ref.shape[1]
    tk = k_ref.shape[1]

    @pl.when(ki == 0)
    def _init():
        # Relayout Q once per (batch, q-tile): (tq, H*hd) -> (H, tq, hd).
        # It is invariant across the kv axis, so cache it in VMEM scratch.
        q_sc[...] = jnp.transpose(q_ref[0].reshape(tq, H, hd), (1, 0, 2))
        m_sc[...] = jnp.full(m_sc.shape, -jnp.inf, m_sc.dtype)
        l_sc[...] = jnp.zeros(l_sc.shape, l_sc.dtype)
        acc_sc[...] = jnp.zeros(acc_sc.shape, acc_sc.dtype)

    # (tk, H*hd) -> (H, tk, hd): batched head layout (one relayout per kv tile
    # instead of per-head sub-lane slicing + concat).
    k = jnp.transpose(k_ref[0].reshape(tk, H, hd), (1, 0, 2))   # bf16
    v = jnp.transpose(v_ref[0].reshape(tk, H, hd), (1, 0, 2))   # bf16

    # Scores for all heads at once; contraction on last dims (no explicit k.T).
    s = jnp.einsum('hqd,hkd->hqk', q_sc[...], k,
                   preferred_element_type=jnp.float32)          # (H, tq, tk) f32

    m_prev = m_sc[...]                                          # (H, tq, 1)
    m_new = jnp.maximum(m_prev, jnp.max(s, axis=-1, keepdims=True))
    alpha = jnp.exp(m_prev - m_new)                             # f32
    p = jnp.exp(s - m_new)                                      # f32
    l_sc[...] = alpha * l_sc[...] + jnp.sum(p, axis=-1, keepdims=True)
    acc_sc[...] = alpha * acc_sc[...] + jnp.einsum(
        'hqk,hkd->hqd', p.astype(v.dtype), v,
        preferred_element_type=jnp.float32)                     # (H, tq, hd) f32
    m_sc[...] = m_new

    @pl.when(ki == pl.num_programs(2) - 1)
    def _finalize():
        o = acc_sc[...] * pl.reciprocal(l_sc[...], approx=True)  # (H, tq, hd) f32
        # Fold the head concat into the output projection: (tq, H*hd) @ (H*hd, C).
        o2 = jnp.transpose(o, (1, 0, 2)).reshape(tq, H * hd).astype(jnp.bfloat16)
        y = jnp.dot(o2, wp_ref[...],
                    preferred_element_type=jnp.float32) + bp_ref[...]
        o_ref[0] = y.astype(o_ref.dtype)


# ---------------------------------------------------------------------------
# Wrapper
# ---------------------------------------------------------------------------
def attention_forward(x, w_qkv, w_proj, b_proj, *, num_heads, head_dim, scale):
    """x: (B, N, C) float32 -> (B, N, C) float32."""
    B, N, C = x.shape
    D = num_heads * head_dim
    assert w_qkv.shape == (C, 3 * D)
    assert w_proj.shape == (D, C)
    assert b_proj.shape == (1, C)

    # Split the fused qkv weight (column order is [q | k | v], heads contiguous),
    # fold the qk scale into Wq, and cast matmul weights to bf16.
    w_q = (w_qkv[:, :D] * scale).astype(jnp.bfloat16)
    w_k = w_qkv[:, D:2 * D].astype(jnp.bfloat16)
    w_v = w_qkv[:, 2 * D:3 * D].astype(jnp.bfloat16)
    w_p = w_proj.astype(jnp.bfloat16)
    b_p = b_proj.astype(jnp.float32)

    tm = _pick_tile(N)

    # ---- Stage A: QKV projection ----
    qkv_cost = pl.CostEstimate(
        flops=int(2 * B * N * C * 3 * D),
        transcendentals=0,
        bytes_accessed=int(4 * B * N * C + 2 * 3 * C * D + 2 * 3 * B * N * D))
    q, k, v = pl.pallas_call(
        _qkv_proj_kernel,
        out_shape=(jax.ShapeDtypeStruct((B, N, D), jnp.bfloat16),
                   jax.ShapeDtypeStruct((B, N, D), jnp.bfloat16),
                   jax.ShapeDtypeStruct((B, N, D), jnp.bfloat16)),
        grid_spec=pltpu.PrefetchScalarGridSpec(
            num_scalar_prefetch=0,
            grid=(B, N // tm),
            in_specs=[
                pl.BlockSpec((1, tm, C), lambda b, i: (b, i, 0)),   # x tile
                pl.BlockSpec((C, D), lambda b, i: (0, 0)),          # Wq (scaled)
                pl.BlockSpec((C, D), lambda b, i: (0, 0)),          # Wk
                pl.BlockSpec((C, D), lambda b, i: (0, 0)),          # Wv
            ],
            out_specs=[
                pl.BlockSpec((1, tm, D), lambda b, i: (b, i, 0)),
                pl.BlockSpec((1, tm, D), lambda b, i: (b, i, 0)),
                pl.BlockSpec((1, tm, D), lambda b, i: (b, i, 0)),
            ],
        ),
        compiler_params=pltpu.CompilerParams(
            dimension_semantics=("parallel", "parallel"),
            vmem_limit_bytes=32 * 1024 * 1024),
        cost_estimate=qkv_cost,
    )(x, w_q, w_k, w_v)

    # ---- Stage B: flash attention + output projection ----
    tq = tk = _pick_tile(N)
    attn_cost = pl.CostEstimate(
        flops=int(4 * B * num_heads * N * N * head_dim + 2 * B * N * D * C),
        transcendentals=int(B * num_heads * N * N),
        bytes_accessed=int(2 * 3 * B * N * D + 2 * D * C + 4 * C + 4 * B * N * C))

    kernel = functools.partial(_flash_attn_kernel,
                               num_heads=num_heads, head_dim=head_dim)
    out = pl.pallas_call(
        kernel,
        out_shape=jax.ShapeDtypeStruct((B, N, C), x.dtype),
        grid_spec=pltpu.PrefetchScalarGridSpec(
            num_scalar_prefetch=0,
            grid=(B, N // tq, N // tk),
            in_specs=[
                pl.BlockSpec((1, tq, D), lambda b, qi, ki: (b, qi, 0)),   # q
                pl.BlockSpec((1, tk, D), lambda b, qi, ki: (b, ki, 0)),   # k
                pl.BlockSpec((1, tk, D), lambda b, qi, ki: (b, ki, 0)),   # v
                pl.BlockSpec((D, C), lambda b, qi, ki: (0, 0)),           # Wproj
                pl.BlockSpec((1, C), lambda b, qi, ki: (0, 0)),           # bproj
            ],
            out_specs=pl.BlockSpec((1, tq, C), lambda b, qi, ki: (b, qi, 0)),
            scratch_shapes=[
                pltpu.VMEM((num_heads, tq, head_dim), jnp.bfloat16),     # cached Q (head layout)
                pltpu.VMEM((num_heads, tq, 1), jnp.float32),             # running max
                pltpu.VMEM((num_heads, tq, 1), jnp.float32),             # running sum
                pltpu.VMEM((num_heads, tq, head_dim), jnp.float32),      # accumulator
            ],
        ),
        compiler_params=pltpu.CompilerParams(
            dimension_semantics=("parallel", "parallel", "arbitrary"),
            vmem_limit_bytes=32 * 1024 * 1024),
        cost_estimate=attn_cost,
    )(q, k, v, w_p, b_p)
    return out


def attention_reference(x, w_qkv, w_proj, b_proj, *, num_heads, head_dim, scale):
    """Pure-JAX f32 reference mirroring the PyTorch forward exactly."""
    B, N, C = x.shape
    D = num_heads * head_dim
    qkv = x @ w_qkv                                           # (B, N, 3D)
    qkv = qkv.reshape(B, N, 3, num_heads, head_dim).transpose(2, 0, 3, 1, 4)
    q, k, v = qkv[0], qkv[1], qkv[2]                          # (B, H, N, hd)
    q = q * scale
    attn = jnp.einsum("bhqd,bhkd->bhqk", q, k)
    attn = jax.nn.softmax(attn, axis=-1)
    o = jnp.einsum("bhqk,bhkd->bhqd", attn, v)
    o = o.transpose(0, 2, 1, 3).reshape(B, N, D)
    return o @ w_proj + b_proj[0]


if __name__ == "__main__":
    # Small config consistent with the PyTorch module (dim=32, num_heads=8).
    B, N, C = 2, 8, 32
    num_heads = 8
    head_dim = C // num_heads             # attn_head_dim=None
    D = num_heads * head_dim
    scale = head_dim ** (-0.5)            # qk_scale=None

    key = jax.random.PRNGKey(0)
    kx, kqkv, kproj, kb = jax.random.split(key, 4)

    x = jax.random.normal(kx, (B, N, C), dtype=jnp.float32)

    def xavier_uniform(k, fan_in, fan_out):
        limit = math.sqrt(6.0 / (fan_in + fan_out))
        return jax.random.uniform(k, (fan_in, fan_out), jnp.float32, -limit, limit)

    w_qkv = xavier_uniform(kqkv, C, 3 * D)      # qkv_bias=False -> no qkv bias
    w_proj = xavier_uniform(kproj, D, C)
    b_proj = 0.01 * jax.random.normal(kb, (1, C), dtype=jnp.float32)

    out = attention_forward(x, w_qkv, w_proj, b_proj,
                            num_heads=num_heads, head_dim=head_dim, scale=scale)
    out = jax.block_until_ready(out)

    ref = attention_reference(x, w_qkv, w_proj, b_proj,
                              num_heads=num_heads, head_dim=head_dim, scale=scale)
    assert out.shape == (B, N, C)
    # bf16 matmuls (f32 accumulation) -> compare with bf16-appropriate tolerance.
    assert jnp.allclose(out, ref, atol=2e-2, rtol=2e-2), \
        "Pallas kernel mismatch vs reference"

    print("KERNEL_OK")
</pallas_src>

<mosaic_0001>
module attributes {stable_mosaic.version = 11 : i64} {
  func.func @_qkv_proj_kernel(%arg0: i32, %arg1: i32, %arg2: memref<1x8x32xf32, #tpu.memory_space<vmem>>, %arg3: memref<32x32xbf16, #tpu.memory_space<vmem>>, %arg4: memref<32x32xbf16, #tpu.memory_space<vmem>>, %arg5: memref<32x32xbf16, #tpu.memory_space<vmem>>, %arg6: memref<1x8x32xbf16, #tpu.memory_space<vmem>>, %arg7: memref<1x8x32xbf16, #tpu.memory_space<vmem>>, %arg8: memref<1x8x32xbf16, #tpu.memory_space<vmem>>) attributes {dimension_semantics = [#tpu.dimension_semantics<parallel>, #tpu.dimension_semantics<parallel>], iteration_bounds = array<i64: 2, 1>, scalar_prefetch = 0 : i64, scratch_operands = 0 : i64, tpu.core_type = #tpu.core_type<tc>, window_params = [{transform_indices = @transform_0, window_bounds = array<i64: 1, 8, 32>}, {pipeline_mode = #tpu.pipeline_mode<synchronous>, transform_indices = @transform_1, window_bounds = array<i64: 32, 32>}, {pipeline_mode = #tpu.pipeline_mode<synchronous>, transform_indices = @transform_2, window_bounds = array<i64: 32, 32>}, {pipeline_mode = #tpu.pipeline_mode<synchronous>, transform_indices = @transform_3, window_bounds = array<i64: 32, 32>}, {transform_indices = @transform_4, window_bounds = array<i64: 1, 8, 32>}, {transform_indices = @transform_5, window_bounds = array<i64: 1, 8, 32>}, {transform_indices = @transform_6, window_bounds = array<i64: 1, 8, 32>}]} {
    %c0 = arith.constant 0 : index
    %c0_0 = arith.constant 0 : index
    %c0_1 = arith.constant 0 : index
    %0 = vector.load %arg2[%c0, %c0_0, %c0_1] : memref<1x8x32xf32, #tpu.memory_space<vmem>>, vector<1x8x32xf32>
    %1 = vector.shape_cast %0 : vector<1x8x32xf32> to vector<8x32xf32>
    %2 = arith.truncf %1 : vector<8x32xf32> to vector<8x32xbf16>
    %c0_2 = arith.constant 0 : index
    %c0_3 = arith.constant 0 : index
    %3 = vector.load %arg3[%c0_2, %c0_3] : memref<32x32xbf16, #tpu.memory_space<vmem>>, vector<32x32xbf16>
    %cst = arith.constant dense<0.000000e+00> : vector<8x32xf32>
    %4 = tpu.matmul %2, %3, %cst {dimension_numbers = #tpu.dot_dimension_numbers<[1], [0], [0], [1], [0, 0, 1, 1], [], []>} : vector<8x32xbf16>, vector<32x32xbf16>, vector<8x32xf32> -> vector<8x32xf32>
    %5 = arith.truncf %4 : vector<8x32xf32> to vector<8x32xbf16>
    %c0_4 = arith.constant 0 : index
    %c0_5 = arith.constant 0 : index
    %c0_6 = arith.constant 0 : index
    %6 = vector.load %arg6[%c0_4, %c0_5, %c0_6] : memref<1x8x32xbf16, #tpu.memory_space<vmem>>, vector<1x8x32xbf16>
    %7 = vector.shape_cast %6 : vector<1x8x32xbf16> to vector<8x32xbf16>
    %8 = vector.shape_cast %5 : vector<8x32xbf16> to vector<1x8x32xbf16>
    tpu.vector_store %arg6[%c0_4, %c0_5, %c0_6], %8 {strides = array<i32>} : memref<1x8x32xbf16, #tpu.memory_space<vmem>>, vector<1x8x32xbf16>,
    %c0_7 = arith.constant 0 : index
    %c0_8 = arith.constant 0 : index
    %9 = vector.load %arg4[%c0_7, %c0_8] : memref<32x32xbf16, #tpu.memory_space<vmem>>, vector<32x32xbf16>
    %cst_9 = arith.constant dense<0.000000e+00> : vector<8x32xf32>
    %10 = tpu.matmul %2, %9, %cst_9 {dimension_numbers = #tpu.dot_dimension_numbers<[1], [0], [0], [1], [0, 0, 1, 1], [], []>} : vector<8x32xbf16>, vector<32x32xbf16>, vector<8x32xf32> -> vector<8x32xf32>
    %11 = arith.truncf %10 : vector<8x32xf32> to vector<8x32xbf16>
    %c0_10 = arith.constant 0 : index
    %c0_11 = arith.constant 0 : index
    %c0_12 = arith.constant 0 : index
    %12 = vector.load %arg7[%c0_10, %c0_11, %c0_12] : memref<1x8x32xbf16, #tpu.memory_space<vmem>>, vector<1x8x32xbf16>
    %13 = vector.shape_cast %12 : vector<1x8x32xbf16> to vector<8x32xbf16>
    %14 = vector.shape_cast %11 : vector<8x32xbf16> to vector<1x8x32xbf16>
    tpu.vector_store %arg7[%c0_10, %c0_11, %c0_12], %14 {strides = array<i32>} : memref<1x8x32xbf16, #tpu.memory_space<vmem>>, vector<1x8x32xbf16>,
    %c0_13 = arith.constant 0 : index
    %c0_14 = arith.constant 0 : index
    %15 = vector.load %arg5[%c0_13, %c0_14] : memref<32x32xbf16, #tpu.memory_space<vmem>>, vector<32x32xbf16>
    %cst_15 = arith.constant dense<0.000000e+00> : vector<8x32xf32>
    %16 = tpu.matmul %2, %15, %cst_15 {dimension_numbers = #tpu.dot_dimension_numbers<[1], [0], [0], [1], [0, 0, 1, 1], [], []>} : vector<8x32xbf16>, vector<32x32xbf16>, vector<8x32xf32> -> vector<8x32xf32>
    %17 = arith.truncf %16 : vector<8x32xf32> to vector<8x32xbf16>
    %c0_16 = arith.constant 0 : index
    %c0_17 = arith.constant 0 : index
    %c0_18 = arith.constant 0 : index
    %18 = vector.load %arg8[%c0_16, %c0_17, %c0_18] : memref<1x8x32xbf16, #tpu.memory_space<vmem>>, vector<1x8x32xbf16>
    %19 = vector.shape_cast %18 : vector<1x8x32xbf16> to vector<8x32xbf16>
    %20 = vector.shape_cast %17 : vector<8x32xbf16> to vector<1x8x32xbf16>
    tpu.vector_store %arg8[%c0_16, %c0_17, %c0_18], %20 {strides = array<i32>} : memref<1x8x32xbf16, #tpu.memory_space<vmem>>, vector<1x8x32xbf16>,
    return
  }
  func.func @transform_0(%arg0: i32, %arg1: i32) -> (i32, i32, i32) {
    %c0_i32 = arith.constant 0 : i32
    %c0_i32_0 = arith.constant 0 : i32
    return %arg0, %arg1, %c0_i32 : i32, i32, i32
  }
  func.func @transform_1(%arg0: i32, %arg1: i32) -> (i32, i32) {
    %c0_i32 = arith.constant 0 : i32
    %c0_i32_0 = arith.constant 0 : i32
    %c0_i32_1 = arith.constant 0 : i32
    return %c0_i32, %c0_i32_0 : i32, i32
  }
  func.func @transform_2(%arg0: i32, %arg1: i32) -> (i32, i32) {
    %c0_i32 = arith.constant 0 : i32
    %c0_i32_0 = arith.constant 0 : i32
    %c0_i32_1 = arith.constant 0 : i32
    return %c0_i32, %c0_i32_0 : i32, i32
  }
  func.func @transform_3(%arg0: i32, %arg1: i32) -> (i32, i32) {
    %c0_i32 = arith.constant 0 : i32
    %c0_i32_0 = arith.constant 0 : i32
    %c0_i32_1 = arith.constant 0 : i32
    return %c0_i32, %c0_i32_0 : i32, i32
  }
  func.func @transform_4(%arg0: i32, %arg1: i32) -> (i32, i32, i32) {
    %c0_i32 = arith.constant 0 : i32
    %c0_i32_0 = arith.constant 0 : i32
    return %arg0, %arg1, %c0_i32 : i32, i32, i32
  }
  func.func @transform_5(%arg0: i32, %arg1: i32) -> (i32, i32, i32) {
    %c0_i32 = arith.constant 0 : i32
    %c0_i32_0 = arith.constant 0 : i32
    return %arg0, %arg1, %c0_i32 : i32, i32, i32
  }
  func.func @transform_6(%arg0: i32, %arg1: i32) -> (i32, i32, i32) {
    %c0_i32 = arith.constant 0 : i32
    %c0_i32_0 = arith.constant 0 : i32
    return %arg0, %arg1, %c0_i32 : i32, i32, i32
  }
}

</mosaic_0001>

<llo_original>
// kernel: tpu_custom_call.1
$region0: #{tpu_custom_call.1}
  #allocation0 [shape = 'u32[]', space=smem, size = 0x4, offset = 0x4, fixed_abs, tag = 'smem constant byte address 0x4 - core index']
  #allocation1 [shape = 'u32[72,128]{1,0:T(1,128)}', space=vmem, size = 0x9000, scoped, tag = 'internal scratch']
  %s0 = inlined_call_operand.hbm [shape: f32[2,8,32], index: 0, kind: input, shape index: {}]
  %s1 = inlined_call_operand.hbm [shape: bf16[32,32], index: 1, kind: input, shape index: {}]
  %s2 = inlined_call_operand.hbm [shape: bf16[32,32], index: 2, kind: input, shape index: {}]
  %s3 = inlined_call_operand.hbm [shape: bf16[32,32], index: 3, kind: input, shape index: {}]
  %s4 = inlined_call_operand.hbm [shape: bf16[2,8,32], index: 4, kind: output, shape index: {0}]
  %s5 = inlined_call_operand.hbm [shape: bf16[2,8,32], index: 5, kind: output, shape index: {1}]
  %s6 = inlined_call_operand.hbm [shape: bf16[2,8,32], index: 6, kind: output, shape index: {2}]
  %7 = xla_tuple %s4, %s5, %s6
  %s8 = sld [smem:[#allocation0]]
  $region81: #{tpu_custom_call.1} parent=0
    _
  %s10 = ssub.s32 1, %s8
  %s11 = scalar_select 0, %s10, %s8
  $region1: #{tpu_custom_call.1} parent=0
    #allocation2 [shape = 'u8[8192]{0}', space=vmem, size = 0x2000, scoped, tag = 'input window, operand 0']
    #allocation3 [shape = 's32[2]{0}', space=sflag, size = 0x8, scoped, tag = 'scoped memory for tpu_custom_call.1']
    #allocation4 [shape = 's32[2]{0}', space=sflag, size = 0x8, scoped, tag = 'scoped memory for tpu_custom_call.1']
    #allocation5 [shape = 'u8[8192]{0}', space=vmem, size = 0x2000, scoped, tag = 'input window, operand 1, single buffered']
    #allocation6 [shape = 's32[1]{0}', space=sflag, size = 0x4, scoped, tag = 'scoped memory for tpu_custom_call.1']
    #allocation7 [shape = 'u8[8192]{0}', space=vmem, size = 0x2000, scoped, tag = 'input window, operand 2, single buffered']
    #allocation8 [shape = 'u8[8192]{0}', space=vmem, size = 0x2000, scoped, tag = 'input window, operand 3, single buffered']
    #allocation9 [shape = 's32[1]{0}', space=sflag, size = 0x4, scoped, tag = 'scoped memory for tpu_custom_call.1']
    #allocation10 [shape = 'u8[4096]{0}', space=vmem, size = 0x1000, scoped, tag = 'output window, operand 0']
    #allocation11 [shape = 'u8[4096]{0}', space=vmem, size = 0x1000, scoped, tag = 'output window, operand 1']
    #allocation12 [shape = 's32[2]{0}', space=sflag, size = 0x8, scoped, tag = 'scoped memory for tpu_custom_call.1']
    #allocation13 [shape = 'u8[4096]{0}', space=vmem, size = 0x1000, scoped, tag = 'output window, operand 2']
    %12 = vsyncpa [#allocation3], 0
    %s13 = scalar_lea.sflag [#allocation3], 1
    %14 = vsyncpa %s13, 0
    %15 = vsyncpa [#allocation6], 0
    %16 = vsyncpa [#allocation9], 0
    %17 = vsyncpa [#allocation4], 0
    %s18 = scalar_lea.sflag [#allocation4], 1
    %19 = vsyncpa %s18, 0
    %20 = vsyncpa [#allocation12], 0
    %s21 = scalar_lea.sflag [#allocation12], 1
    %22 = vsyncpa %s21, 0
    loop: start=0, step=1, limit=4
    $region2: #{tpu_custom_call.1} parent=1 // loop_pre_header
      _
    $region3: #{tpu_custom_call.1} parent=1 // loop_header
      %s24 = sphi 0, %s28
      %p25 = scmp.ge.s32.totalorder %s24, 4
      %s31 = sphi 0, %s43
      %s32 = sphi 0, %s39
      %s33 = sphi 0, %s31
      %s34 = sphi 0, %s32
      %s35 = sphi 0, %s33
      %s36 = sphi 0, %s34
      %s48 = sphi 0, %s50
      %s51 = sphi 0, %s48
      %s52 = sphi 0, %s51
      %s68 = sphi 0, %s52
      %s72 = sphi 0, %s72
      %s74 = sphi 0, %s72
      %s75 = sphi 0, %s74
      %s89 = sphi 0, %s75
      %s93 = sphi 0, %s93
      %s95 = sphi 0, %s93
      %s96 = sphi 0, %s95
      %s110 = sphi 0, %s96
      %s114 = sphi 0, %s114
      %s116 = sphi 0, %s114
      %s117 = sphi 0, %s116
      %s131 = sphi 0, %s117
      %s139 = sphi 0, %s141
      %s142 = sphi 0, %s139
      %s143 = sphi 0, %s142
      %s159 = sphi 0, %s143
      %s167 = sphi 0, %s169
      %s170 = sphi 0, %s167
      %s171 = sphi 0, %s170
      %s187 = sphi 0, %s171
      %s195 = sphi 0, %s197
      %s198 = sphi 0, %s195
      %s199 = sphi 0, %s198
      %s215 = sphi 0, %s199
    $region4: #{tpu_custom_call.1} parent=1 // loop_header_branch
      %27 = sbr.rel (%p25) target = $region8
    $region5: #{tpu_custom_call.1} parent=1 // loop_body
      %s29 = ssub.s32 %s24, 1
      %s30 = ssub.s32 %s24, 2
      %s37 = sadd.s32 1, %s32
      %p38 = scmp.ge.s32.totalorder %s37, 1
      %s39 = scalar_select %p38, 0, %s37
      %s40 = sadd.s32 1, %s31
      %s41 = scalar_select %p38, %s40, %s31
      %p42 = scmp.ge.s32.totalorder %s41, 2
      %s43 = scalar_select %p42, 0, %s41
      %s44 = ssub.s32 %s31, %s43
      %s45 = ssub.s32 %s32, %s39
      %s46 = sor.u32 %s44, %s45
      %p47 = scmp.eq.s32.totalorder %s46, 0
      %s49 = sadd.s32 %s48, 1
      %s50 = scalar_select %p47, %s48, %s49
      %p53 = pneg %p47
      %p54 = scmp.eq.s32.totalorder %s24, 1
      %p55 = por %p53, %p54
      %p56 = scmp.ne.s32.totalorder %s48, %s51
      %p57 = scmp.eq.s32.totalorder %s24, 0
      %p58 = por %p56, %p57
      %p59 = scmp.ne.s32.totalorder %s48, %s51
      %p60 = scmp.eq.s32.totalorder %s29, 1
      %p61 = por %p59, %p60
      %p62 = scmp.ne.s32.totalorder %s51, %s52
      %p63 = scmp.eq.s32.totalorder %s29, 0
      %p64 = por %p62, %p63
      %p65 = scmp.ne.s32.totalorder %s51, %s52
      %p66 = scmp.eq.s32.totalorder %s30, 1
      %p67 = por %p65, %p66
      %p69 = scmp.ne.s32.totalorder %s52, %s68
      %p70 = scmp.eq.s32.totalorder %s30, 0
      %p71 = por %p69, %p70
      %s73 = sadd.s32 %s72, 1
      %p76 = scmp.eq.s32.totalorder %s24, 1
      %p77 = scmp.ne.s32.totalorder %s72, %s74
      %p78 = scmp.eq.s32.totalorder %s24, 0
      %p79 = por %p77, %p78
      %p80 = scmp.ne.s32.totalorder %s72, %s74
      %p81 = scmp.eq.s32.totalorder %s29, 1
      %p82 = por %p80, %p81
      %p83 = scmp.ne.s32.totalorder %s74, %s75
      %p84 = scmp.eq.s32.totalorder %s29, 0
      %p85 = por %p83, %p84
      %p86 = scmp.ne.s32.totalorder %s74, %s75
      %p87 = scmp.eq.s32.totalorder %s30, 1
      %p88 = por %p86, %p87
      %p90 = scmp.ne.s32.totalorder %s75, %s89
      %p91 = scmp.eq.s32.totalorder %s30, 0
      %p92 = por %p90, %p91
      %s94 = sadd.s32 %s93, 1
      %p97 = scmp.eq.s32.totalorder %s24, 1
      %p98 = scmp.ne.s32.totalorder %s93, %s95
      %p99 = scmp.eq.s32.totalorder %s24, 0
      %p100 = por %p98, %p99
      %p101 = scmp.ne.s32.totalorder %s93, %s95
      %p102 = scmp.eq.s32.totalorder %s29, 1
      %p103 = por %p101, %p102
      %p104 = scmp.ne.s32.totalorder %s95, %s96
      %p105 = scmp.eq.s32.totalorder %s29, 0
      %p106 = por %p104, %p105
      %p107 = scmp.ne.s32.totalorder %s95, %s96
      %p108 = scmp.eq.s32.totalorder %s30, 1
      %p109 = por %p107, %p108
      %p111 = scmp.ne.s32.totalorder %s96, %s110
      %p112 = scmp.eq.s32.totalorder %s30, 0
      %p113 = por %p111, %p112
      %s115 = sadd.s32 %s114, 1
      %p118 = scmp.eq.s32.totalorder %s24, 1
      %p119 = scmp.ne.s32.totalorder %s114, %s116
      %p120 = scmp.eq.s32.totalorder %s24, 0
      %p121 = por %p119, %p120
      %p122 = scmp.ne.s32.totalorder %s114, %s116
      %p123 = scmp.eq.s32.totalorder %s29, 1
      %p124 = por %p122, %p123
      %p125 = scmp.ne.s32.totalorder %s116, %s117
      %p126 = scmp.eq.s32.totalorder %s29, 0
      %p127 = por %p125, %p126
      %p128 = scmp.ne.s32.totalorder %s116, %s117
      %p129 = scmp.eq.s32.totalorder %s30, 1
      %p130 = por %p128, %p129
      %p132 = scmp.ne.s32.totalorder %s117, %s131
      %p133 = scmp.eq.s32.totalorder %s30, 0
      %p134 = por %p132, %p133
      %s135 = ssub.s32 %s31, %s43
      %s136 = ssub.s32 %s32, %s39
      %s137 = sor.u32 %s135, %s136
      %p138 = scmp.eq.s32.totalorder %s137, 0
      %s140 = sadd.s32 %s139, 1
      %s141 = scalar_select %p138, %s139, %s140
      %p144 = pneg %p138
      %p145 = scmp.eq.s32.totalorder %s24, 1
      %p146 = por %p144, %p145
      %p147 = scmp.ne.s32.totalorder %s139, %s142
      %p148 = scmp.eq.s32.totalorder %s24, 0
      %p149 = por %p147, %p148
      %p150 = scmp.ne.s32.totalorder %s139, %s142
      %p151 = scmp.eq.s32.totalorder %s29, 1
      %p152 = por %p150, %p151
      %p153 = scmp.ne.s32.totalorder %s142, %s143
      %p154 = scmp.eq.s32.totalorder %s29, 0
      %p155 = por %p153, %p154
      %p156 = scmp.ne.s32.totalorder %s142, %s143
      %p157 = scmp.eq.s32.totalorder %s30, 1
      %p158 = por %p156, %p157
      %p160 = scmp.ne.s32.totalorder %s143, %s159
      %p161 = scmp.eq.s32.totalorder %s30, 0
      %p162 = por %p160, %p161
      %s163 = ssub.s32 %s31, %s43
      %s164 = ssub.s32 %s32, %s39
      %s165 = sor.u32 %s163, %s164
      %p166 = scmp.eq.s32.totalorder %s165, 0
      %s168 = sadd.s32 %s167, 1
      %s169 = scalar_select %p166, %s167, %s168
      %p172 = pneg %p166
      %p173 = scmp.eq.s32.totalorder %s24, 1
      %p174 = por %p172, %p173
      %p175 = scmp.ne.s32.totalorder %s167, %s170
      %p176 = scmp.eq.s32.totalorder %s24, 0
      %p177 = por %p175, %p176
      %p178 = scmp.ne.s32.totalorder %s167, %s170
      %p179 = scmp.eq.s32.totalorder %s29, 1
      %p180 = por %p178, %p179
      %p181 = scmp.ne.s32.totalorder %s170, %s171
      %p182 = scmp.eq.s32.totalorder %s29, 0
      %p183 = por %p181, %p182
      %p184 = scmp.ne.s32.totalorder %s170, %s171
      %p185 = scmp.eq.s32.totalorder %s30, 1
      %p186 = por %p184, %p185
      %p188 = scmp.ne.s32.totalorder %s171, %s187
      %p189 = scmp.eq.s32.totalorder %s30, 0
      %p190 = por %p188, %p189
      %s191 = ssub.s32 %s31, %s43
      %s192 = ssub.s32 %s32, %s39
      %s193 = sor.u32 %s191, %s192
      %p194 = scmp.eq.s32.totalorder %s193, 0
      %s196 = sadd.s32 %s195, 1
      %s197 = scalar_select %p194, %s195, %s196
      %p200 = pneg %p194
      %p201 = scmp.eq.s32.totalorder %s24, 1
      %p202 = por %p200, %p201
      %p203 = scmp.ne.s32.totalorder %s195, %s198
      %p204 = scmp.eq.s32.totalorder %s24, 0
      %p205 = por %p203, %p204
      %p206 = scmp.ne.s32.totalorder %s195, %s198
      %p207 = scmp.eq.s32.totalorder %s29, 1
      %p208 = por %p206, %p207
      %p209 = scmp.ne.s32.totalorder %s198, %s199
      %p210 = scmp.eq.s32.totalorder %s29, 0
      %p211 = por %p209, %p210
      %p212 = scmp.ne.s32.totalorder %s198, %s199
      %p213 = scmp.eq.s32.totalorder %s30, 1
      %p214 = por %p212, %p213
      %p216 = scmp.ne.s32.totalorder %s199, %s215
      %p217 = scmp.eq.s32.totalorder %s30, 0
      %p218 = por %p216, %p217
      %p219 = scmp.le.s32.totalorder 1, %s24
      %p220 = scmp.lt.s32.totalorder %s24, 3
      %p221 = pnand %p219, %p220
      %p222 = pneg %p221
      // Predicated region
      $region9: #{tpu_custom_call.1} parent=5 // pred_check
        _
      $region10: #{tpu_custom_call.1} parent=5 // pred_check_branch
        %224 = sbr.rel (%p221) target = $region12
      $region11: #{tpu_custom_call.1} parent=5 // pred_region
        %s225 = ssub.s32 %s24, 1
        // Predicated region
        $region13: #{tpu_custom_call.1} parent=11 // pred_check
          %p226 = pneg %p85
        $region14: #{tpu_custom_call.1} parent=11 // pred_check_branch
          %228 = sbr.rel (%p226) target = $region16
        $region15: #{tpu_custom_call.1} parent=11 // pred_region
          %230 = vsyncadd [#allocation6], 0
          %s231 = sshll.u32 %s1, 4
          %s232 = int_to_ptr.hbm [resolvable:$true] %s231
          %s233 = sshll.u32 [#allocation5], 4
          %s234 = int_to_ptr.vmem [resolvable:$true] %s233
          %239 = dma.hbm_to_vmem [thread:$0]  %s232, 256, %s234, [#allocation6], 64, 64, 4
        $region16: #{tpu_custom_call.1} parent=11 // pred_fallthru
          _
        // Predicated region
        $region17: #{tpu_custom_call.1} parent=11 // pred_check
          %p240 = pneg %p106
        $region18: #{tpu_custom_call.1} parent=11 // pred_check_branch
          %242 = sbr.rel (%p240) target = $region20
        $region19: #{tpu_custom_call.1} parent=11 // pred_region
          %244 = vsyncadd [#allocation6], 0
          %s245 = sshll.u32 %s2, 4
          %s246 = int_to_ptr.hbm [resolvable:$true] %s245
          %s247 = sshll.u32 [#allocation7], 4
          %s248 = int_to_ptr.vmem [resolvable:$true] %s247
          %253 = dma.hbm_to_vmem [thread:$0]  %s246, 256, %s248, [#allocation6], 64, 64, 4
        $region20: #{tpu_custom_call.1} parent=11 // pred_fallthru
          _
        // Predicated region
        $region21: #{tpu_custom_call.1} parent=11 // pred_check
          %p254 = pneg %p127
        $region22: #{tpu_custom_call.1} parent=11 // pred_check_branch
          %256 = sbr.rel (%p254) target = $region24
        $region23: #{tpu_custom_call.1} parent=11 // pred_region
          %258 = vsyncadd [#allocation9], 0
          %s259 = sshll.u32 %s3, 4
          %s260 = int_to_ptr.hbm [resolvable:$true] %s259
          %s261 = sshll.u32 [#allocation8], 4
          %s262 = int_to_ptr.vmem [resolvable:$true] %s261
          %267 = dma.hbm_to_vmem [thread:$0]  %s260, 256, %s262, [#allocation9], 64, 64, 4
        $region24: #{tpu_custom_call.1} parent=11 // pred_fallthru
          _
      $region12: #{tpu_custom_call.1} parent=5 // pred_fallthru
        _
      %p268 = scmp.lt.s32.totalorder %s24, 2
      // Predicated region
      $region25: #{tpu_custom_call.1} parent=5 // pred_check
        %p269 = pneg %p268
      $region26: #{tpu_custom_call.1} parent=5 // pred_check_branch
        %271 = sbr.rel (%p269) target = $region28
      $region27: #{tpu_custom_call.1} parent=5 // pred_region
        // Predicated region
        $region29: #{tpu_custom_call.1} parent=27 // pred_check
          %p272 = pneg %p58
        $region30: #{tpu_custom_call.1} parent=27 // pred_check_branch
          %274 = sbr.rel (%p272) target = $region32
        $region31: #{tpu_custom_call.1} parent=27 // pred_region
          %s275 = sand.u32 %s48, 1
          %s276 = scalar_lea.sflag [#allocation3], %s275
          %s277 = sand.u32 %s48, 1
          %s278 = smul.addr %s277, 8
          %s279 = scalar_lea.vmem [#allocation2], %s278
          %281 = vsyncadd %s276, 0
          %s282 = sadd.s32 %s32, %s31
          %s283 = smul.addr %s282, 8
          %s284 = scalar_lea.hbm %s0, %s283
          %s286 = sshll.u32 %s284, 4
          %s287 = int_to_ptr.hbm [resolvable:$true] %s286
          %s288 = sshll.u32 %s279, 4
          %s289 = int_to_ptr.vmem [resolvable:$true] %s288
          %291 = dma.hbm_to_vmem [thread:$0]  %s287, 128, %s289, %s276
        $region32: #{tpu_custom_call.1} parent=27 // pred_fallthru
          _
      $region28: #{tpu_custom_call.1} parent=5 // pred_fallthru
        _
      %p292 = scmp.le.s32.totalorder 1, %s24
      %p293 = scmp.lt.s32.totalorder %s24, 3
      %p294 = pnand %p292, %p293
      %p295 = pneg %p294
      // Predicated region
      $region33: #{tpu_custom_call.1} parent=5 // pred_check
        _
      $region34: #{tpu_custom_call.1} parent=5 // pred_check_branch
        %297 = sbr.rel (%p294) target = $region36
      $region35: #{tpu_custom_call.1} parent=5 // pred_region
        %s298 = ssub.s32 %s24, 1
        %s299 = sand.u32 %s51, 1
        %s300 = scalar_lea.sflag [#allocation3], %s299
        %s301 = sand.u32 %s51, 1
        %s302 = smul.addr %s301, 8
        %s303 = scalar_lea.vmem [#allocation2], %s302
        // Predicated region
        $region37: #{tpu_custom_call.1} parent=35 // pred_check
          %p304 = pneg %p64
        $region38: #{tpu_custom_call.1} parent=35 // pred_check_branch
          %306 = sbr.rel (%p304) target = $region40
        $region39: #{tpu_custom_call.1} parent=35 // pred_region
          %308 = dma.done %s300, 128
        $region40: #{tpu_custom_call.1} parent=35 // pred_fallthru
          _
        // Predicated region
        $region41: #{tpu_custom_call.1} parent=35 // pred_check
          %p309 = pneg %p85
        $region42: #{tpu_custom_call.1} parent=35 // pred_check_branch
          %311 = sbr.rel (%p309) target = $region44
        $region43: #{tpu_custom_call.1} parent=35 // pred_region
          %313 = dma.done [#allocation6], 256
        $region44: #{tpu_custom_call.1} parent=35 // pred_fallthru
          _
        // Predicated region
        $region45: #{tpu_custom_call.1} parent=35 // pred_check
          %p314 = pneg %p106
        $region46: #{tpu_custom_call.1} parent=35 // pred_check_branch
          %316 = sbr.rel (%p314) target = $region48
        $region47: #{tpu_custom_call.1} parent=35 // pred_region
          %318 = dma.done [#allocation6], 256
        $region48: #{tpu_custom_call.1} parent=35 // pred_fallthru
          _
        // Predicated region
        $region49: #{tpu_custom_call.1} parent=35 // pred_check
          %p319 = pneg %p127
        $region50: #{tpu_custom_call.1} parent=35 // pred_check_branch
          %321 = sbr.rel (%p319) target = $region52
        $region51: #{tpu_custom_call.1} parent=35 // pred_region
          %323 = dma.done [#allocation9], 256
        $region52: #{tpu_custom_call.1} parent=35 // pred_fallthru
          _
        %s324 = sand.u32 %s51, 1
        %s325 = scalar_lea.sflag [#allocation3], %s324
        %s326 = sand.u32 %s51, 1
        %s327 = smul.addr %s326, 8
        %s328 = scalar_lea.vmem [#allocation2], %s327
        %p329 = pneg %p64
        %p330 = pneg %p61
        %p331 = pneg %p85
        %p332 = pneg %p82
        %p333 = pneg %p106
        %p334 = pneg %p103
        %p335 = pneg %p127
        %p336 = pneg %p124
        %p337 = pneg %p155
        %p338 = pneg %p152
        %s339 = sand.u32 %s142, 1
        %s340 = scalar_lea.sflag [#allocation4], %s339
        %s341 = sand.u32 %s142, 1
        %s342 = smul.addr %s341, 4
        %s343 = scalar_lea.vmem [#allocation10], %s342
        %p344 = pneg %p183
        %p345 = pneg %p180
        %s346 = sand.u32 %s29, 1
        %s347 = scalar_lea.sflag [#allocation12], %s346
        %s348 = sand.u32 %s170, 1
        %s349 = smul.addr %s348, 4
        %s350 = scalar_lea.vmem [#allocation11], %s349
        %p351 = pneg %p211
        %p352 = pneg %p208
        %s353 = sand.u32 %s29, 1
        %s354 = scalar_lea.sflag [#allocation12], %s353
        %s355 = sand.u32 %s198, 1
        %s356 = smul.addr %s355, 4
        %s357 = scalar_lea.vmem [#allocation13], %s356
        %v359 = vld [vmem:[%s303] sm:$0xff]
        %v360 = vpack.c.bf16 %v359, %v359
        %v361 = vld [vmem:[#allocation5] sm:$0xf]
        %v362 = vld [vmem:[#allocation5 + $0x4] sm:$0xf]
        %v363 = vld [vmem:[#allocation5 + $0x8] sm:$0xf]
        %v364 = vld [vmem:[#allocation5 + $0xc] sm:$0xf]
        %v369 = vunpack.c.l.b16 %v361
        %v370 = vunpack.c.l.b16 %v362
        %v371 = vunpack.c.l.b16 %v363
        %v372 = vunpack.c.l.b16 %v364
        %v373 = vpack.c.b16 %v370, %v369
        %v374 = vpack.c.b16 %v372, %v371
        %vm377 = vcmask 261120
        %v379 = vsel %vm377, %v360, 0
        %381 = vmatpush.bf16.msra.mxu0 0
        %382 = vmatpush.bf16.msra.mxu0 0
        %383 = vmatpush.bf16.msra.mxu0 0
        %384 = vmatpush.bf16.msra.mxu0 0
        %385 = vmatpush.bf16.msra.mxu0 0
        %386 = vmatpush.bf16.msra.mxu0 0
        %387 = vmatpush.bf16.msra.mxu0 %v374
        %388 = vmatpush.bf16.msra.mxu0 %v373
        %389 = vmatmul.bf16.gmra.mxu0 %v379
        %v390 = vpop.f32.mrf.mxu0
        %v391 = vadd.f32 0.0, %v390
        %v392 = vpop.f32.mrf.mxu0
        %393 = vdwg.mxu0
        %v394 = vpack.c.bf16 %v391, %v391
        %vm395 = vcmask 257024
        %396 = vst.msk [vmem:[%s343] sm:$0xf] %vm395, %v394
        %v397 = vld [vmem:[#allocation7] sm:$0xf]
        %v398 = vld [vmem:[#allocation7 + $0x4] sm:$0xf]
        %v399 = vld [vmem:[#allocation7 + $0x8] sm:$0xf]
        %v400 = vld [vmem:[#allocation7 + $0xc] sm:$0xf]
        %v405 = vunpack.c.l.b16 %v397
        %v406 = vunpack.c.l.b16 %v398
        %v407 = vunpack.c.l.b16 %v399
        %v408 = vunpack.c.l.b16 %v400
        %v409 = vpack.c.b16 %v406, %v405
        %v410 = vpack.c.b16 %v408, %v407
        %413 = vmatpush.bf16.msra.mxu0 0
        %414 = vmatpush.bf16.msra.mxu0 0
        %415 = vmatpush.bf16.msra.mxu0 0
        %416 = vmatpush.bf16.msra.mxu0 0
        %417 = vmatpush.bf16.msra.mxu0 0
        %418 = vmatpush.bf16.msra.mxu0 0
        %419 = vmatpush.bf16.msra.mxu0 %v410
        %420 = vmatpush.bf16.msra.mxu0 %v409
        %421 = vmatmul.bf16.gmra.mxu0 %v379
        %v422 = vpop.f32.mrf.mxu0
        %v423 = vadd.f32 0.0, %v422
        %v424 = vpop.f32.mrf.mxu0
        %425 = vdwg.mxu0
        %v426 = vpack.c.bf16 %v423, %v423
        %427 = vst.msk [vmem:[%s350] sm:$0xf] %vm395, %v426
        %v428 = vld [vmem:[#allocation8] sm:$0xf]
        %v429 = vld [vmem:[#allocation8 + $0x4] sm:$0xf]
        %v430 = vld [vmem:[#allocation8 + $0x8] sm:$0xf]
        %v431 = vld [vmem:[#allocation8 + $0xc] sm:$0xf]
        %v436 = vunpack.c.l.b16 %v428
        %v437 = vunpack.c.l.b16 %v429
        %v438 = vunpack.c.l.b16 %v430
        %v439 = vunpack.c.l.b16 %v431
        %v440 = vpack.c.b16 %v437, %v436
        %v441 = vpack.c.b16 %v439, %v438
        %444 = vmatpush.bf16.msra.mxu0 0
        %445 = vmatpush.bf16.msra.mxu0 0
        %446 = vmatpush.bf16.msra.mxu0 0
        %447 = vmatpush.bf16.msra.mxu0 0
        %448 = vmatpush.bf16.msra.mxu0 0
        %449 = vmatpush.bf16.msra.mxu0 0
        %450 = vmatpush.bf16.msra.mxu0 %v441
        %451 = vmatpush.bf16.msra.mxu0 %v440
        %452 = vmatmul.bf16.gmra.mxu0 %v379
        %v453 = vpop.f32.mrf.mxu0
        %v454 = vadd.f32 0.0, %v453
        %v455 = vpop.f32.mrf.mxu0
        %456 = vdwg.mxu0
        %v457 = vpack.c.bf16 %v454, %v454
        %458 = vst.msk [vmem:[%s357] sm:$0xf] %vm395, %v457
        %s459 = sand.u32 %s142, 1
        %s460 = scalar_lea.sflag [#allocation4], %s459
        %s461 = sand.u32 %s142, 1
        %s462 = smul.addr %s461, 4
        %s463 = scalar_lea.vmem [#allocation10], %s462
        %s464 = sand.u32 %s29, 1
        %s465 = scalar_lea.sflag [#allocation12], %s464
        %s466 = sand.u32 %s170, 1
        %s467 = smul.addr %s466, 4
        %s468 = scalar_lea.vmem [#allocation11], %s467
        %s469 = sand.u32 %s29, 1
        %s470 = scalar_lea.sflag [#allocation12], %s469
        %s471 = sand.u32 %s198, 1
        %s472 = smul.addr %s471, 4
        %s473 = scalar_lea.vmem [#allocation13], %s472
        // Predicated region
        $region53: #{tpu_custom_call.1} parent=35 // pred_check
          %p474 = pneg %p152
        $region54: #{tpu_custom_call.1} parent=35 // pred_check_branch
          %476 = sbr.rel (%p474) target = $region56
        $region55: #{tpu_custom_call.1} parent=35 // pred_region
          %478 = vsyncadd %s460, 0
          %s479 = sadd.s32 %s34, %s33
          %s480 = smul.addr %s479, 4
          %s481 = scalar_lea.hbm %s4, %s480
          %s483 = sshll.u32 %s463, 4
          %s484 = int_to_ptr.vmem [resolvable:$true] %s483
          %s485 = sshll.u32 %s481, 4
          %s486 = int_to_ptr.hbm [resolvable:$true] %s485
          %488 = dma.vmem_to_hbm [thread:$0]  %s484, 64, %s486, %s460
        $region56: #{tpu_custom_call.1} parent=35 // pred_fallthru
          _
        // Predicated region
        $region57: #{tpu_custom_call.1} parent=35 // pred_check
          %p489 = pneg %p180
        $region58: #{tpu_custom_call.1} parent=35 // pred_check_branch
          %491 = sbr.rel (%p489) target = $region60
        $region59: #{tpu_custom_call.1} parent=35 // pred_region
          %493 = vsyncadd %s465, 0
          %s494 = sadd.s32 %s34, %s33
          %s495 = smul.addr %s494, 4
          %s496 = scalar_lea.hbm %s5, %s495
          %s498 = sshll.u32 %s468, 4
          %s499 = int_to_ptr.vmem [resolvable:$true] %s498
          %s500 = sshll.u32 %s496, 4
          %s501 = int_to_ptr.hbm [resolvable:$true] %s500
          %503 = dma.vmem_to_hbm [thread:$0]  %s499, 64, %s501, %s465
        $region60: #{tpu_custom_call.1} parent=35 // pred_fallthru
          _
        // Predicated region
        $region61: #{tpu_custom_call.1} parent=35 // pred_check
          %p504 = pneg %p208
        $region62: #{tpu_custom_call.1} parent=35 // pred_check_branch
          %506 = sbr.rel (%p504) target = $region64
        $region63: #{tpu_custom_call.1} parent=35 // pred_region
          %508 = vsyncadd %s470, 0
          %s509 = sadd.s32 %s34, %s33
          %s510 = smul.addr %s509, 4
          %s511 = scalar_lea.hbm %s6, %s510
          %s513 = sshll.u32 %s473, 4
          %s514 = int_to_ptr.vmem [resolvable:$true] %s513
          %s515 = sshll.u32 %s511, 4
          %s516 = int_to_ptr.hbm [resolvable:$true] %s515
          %518 = dma.vmem_to_hbm [thread:$0]  %s514, 64, %s516, %s470
        $region64: #{tpu_custom_call.1} parent=35 // pred_fallthru
          _
      $region36: #{tpu_custom_call.1} parent=5 // pred_fallthru
        _
      %p519 = scmp.le.s32.totalorder 2, %s24
      // Predicated region
      $region65: #{tpu_custom_call.1} parent=5 // pred_check
        %p520 = pneg %p519
      $region66: #{tpu_custom_call.1} parent=5 // pred_check_branch
        %522 = sbr.rel (%p520) target = $region68
      $region67: #{tpu_custom_call.1} parent=5 // pred_region
        %s523 = ssub.s32 %s24, 2
        // Predicated region
        $region69: #{tpu_custom_call.1} parent=67 // pred_check
          %p524 = pneg %p158
        $region70: #{tpu_custom_call.1} parent=67 // pred_check_branch
          %526 = sbr.rel (%p524) target = $region72
        $region71: #{tpu_custom_call.1} parent=67 // pred_region
          %s527 = sand.u32 %s143, 1
          %s528 = scalar_lea.sflag [#allocation4], %s527
          %s529 = sand.u32 %s143, 1
          %s530 = smul.addr %s529, 4
          %s531 = scalar_lea.vmem [#allocation10], %s530
          %533 = dma.done %s528, 64
        $region72: #{tpu_custom_call.1} parent=67 // pred_fallthru
          _
        // Predicated region
        $region73: #{tpu_custom_call.1} parent=67 // pred_check
          %p534 = pneg %p186
        $region74: #{tpu_custom_call.1} parent=67 // pred_check_branch
          %536 = sbr.rel (%p534) target = $region76
        $region75: #{tpu_custom_call.1} parent=67 // pred_region
          %s537 = sand.u32 %s30, 1
          %s538 = scalar_lea.sflag [#allocation12], %s537
          %s539 = sand.u32 %s171, 1
          %s540 = smul.addr %s539, 4
          %s541 = scalar_lea.vmem [#allocation11], %s540
          %543 = dma.done %s538, 64
        $region76: #{tpu_custom_call.1} parent=67 // pred_fallthru
          _
        // Predicated region
        $region77: #{tpu_custom_call.1} parent=67 // pred_check
          %p544 = pneg %p214
        $region78: #{tpu_custom_call.1} parent=67 // pred_check_branch
          %546 = sbr.rel (%p544) target = $region80
        $region79: #{tpu_custom_call.1} parent=67 // pred_region
          %s547 = sand.u32 %s30, 1
          %s548 = scalar_lea.sflag [#allocation12], %s547
          %s549 = sand.u32 %s199, 1
          %s550 = smul.addr %s549, 4
          %s551 = scalar_lea.vmem [#allocation13], %s550
          %553 = dma.done %s548, 64
        $region80: #{tpu_custom_call.1} parent=67 // pred_fallthru
          _
      $region68: #{tpu_custom_call.1} parent=5 // pred_fallthru
        _
    $region6: #{tpu_custom_call.1} parent=1 // loop_footer
      %s28 = sadd.s32 1, %s24
    $region7: #{tpu_custom_call.1} parent=1 // loop_footer_branch
      %23 = sbr.rel target = $region3
    $region8: #{tpu_custom_call.1} parent=1 // loop_exit
      _
    %554 = vsyncpa [#allocation3], 1
    %s555 = scalar_lea.sflag [#allocation3], 1
    %556 = vsyncpa %s555, 1
    %557 = vsyncpa [#allocation6], 1
    %558 = vsyncpa [#allocation9], 1
    %559 = vsyncpa [#allocation4], 1
    %s560 = scalar_lea.sflag [#allocation4], 1
    %561 = vsyncpa %s560, 1
    %562 = vsyncpa [#allocation12], 1
    %s563 = scalar_lea.sflag [#allocation12], 1
    %564 = vsyncpa %s563, 1

</llo_original>
